<compile_context>
chip_gen: v7x
topology: tpu7x:2x2x1
jax: 0.10.0
libtpu: 0.0.40
codegen_flags: <defaults>
</compile_context>

<pallas_src>
import jax
import jax.numpy as jnp
from jax.experimental import pallas as pl
from jax.experimental.pallas import tpu as pltpu

# Leading "parallel" grid axis length: lets v7x split DMA issue over its two
# TensorCores; on v5e/v6e it is just a 2-iteration sequential loop.
_NUM_PARTITIONS = 2


def _make_copy_kernel(n, partitions):
    """Build a kernel that, at grid step p, DMAs the tensors of partition p.

    Kernel args: n input HBM refs, n output HBM refs, one DMA-semaphore array
    (shape (n,)) as scratch.  All copies are raw HBM->HBM; nothing touches
    VMEM or the vector units.
    """

    def kernel(*args):
        in_refs = args[:n]
        out_refs = args[n:2 * n]
        sems = args[2 * n]
        step = pl.program_id(0)

        for part_idx, tensor_ids in enumerate(partitions):
            if not tensor_ids:
                continue

            @pl.when(step == part_idx)
            def _copy(tensor_ids=tensor_ids):
                copies = [
                    pltpu.make_async_copy(in_refs[t], out_refs[t], sems.at[t])
                    for t in tensor_ids
                ]
                # Issue every DMA of this partition, then wait on all of them
                # so the semaphore counts are drained before the step ends.
                for c in copies:
                    c.start()
                for c in copies:
                    c.wait()

    return kernel


def _identity_copy(xs):
    """One pallas_call: direct HBM->HBM DMA copy of every array in `xs`."""
    n = len(xs)
    num_parts = min(_NUM_PARTITIONS, n)
    # Round-robin tensors over the parallel grid steps.
    partitions = [list(range(p, n, num_parts)) for p in range(num_parts)]

    bytes_accessed = sum(2 * int(x.size) * x.dtype.itemsize for x in xs)

    hbm_spec = pl.BlockSpec(memory_space=pl.ANY)
    out_shapes = tuple(jax.ShapeDtypeStruct(x.shape, x.dtype) for x in xs)

    outs = pl.pallas_call(
        _make_copy_kernel(n, partitions),
        out_shape=out_shapes,
        grid=(num_parts,),
        in_specs=[hbm_spec] * n,
        out_specs=tuple([hbm_spec] * n),
        scratch_shapes=[pltpu.SemaphoreType.DMA((n,))],
        compiler_params=pltpu.CompilerParams(
            dimension_semantics=("parallel",),
        ),
        cost_estimate=pl.CostEstimate(
            flops=0, transcendentals=0, bytes_accessed=bytes_accessed),
    )(*xs)

    if not isinstance(outs, (list, tuple)):
        outs = (outs,)
    return list(outs)


class Neck:
    """JAX/Pallas counterpart of terratorch's abstract `Neck` base class.

    Concrete behavior implemented is the base-class contract: the channel list
    is returned unchanged and the feature list is passed through (every scale
    copied by direct HBM->HBM DMA inside one Pallas TPU kernel, preserving
    shape/dtype/values, with no input/output aliasing).
    """

    def __init__(self, channel_list):
        self.channel_list = list(channel_list)

    def process_channel_list(self, channel_list):
        return list(channel_list)

    def forward(self, feature_list):
        feature_list = [jnp.asarray(x) for x in feature_list]
        if not feature_list:
            return []

        results = [None] * len(feature_list)
        dma_pos, dma_xs = [], []
        for i, x in enumerate(feature_list):
            if x.size == 0:
                # Nothing to copy for an empty tensor.
                results[i] = x
            else:
                dma_pos.append(i)
                dma_xs.append(x)

        if dma_xs:
            outs = _identity_copy(dma_xs)
            for pos, y in zip(dma_pos, outs):
                results[pos] = y
        return results

    __call__ = forward


if __name__ == "__main__":
    key = jax.random.PRNGKey(0)
    channel_list = [4, 8, 3]
    # Multi-scale NCHW feature maps; the last one exercises an arbitrary,
    # non-tile-aligned shape (handled identically by the raw DMA path).
    shapes = [(2, 4, 16, 16), (2, 8, 16, 16), (2, 3, 5, 5)]

    feats = []
    for shape in shapes:
        key, sub = jax.random.split(key)
        feats.append(jax.random.normal(sub, shape, dtype=jnp.float32))

    neck = Neck(channel_list)
    assert neck.process_channel_list(channel_list) == channel_list

    outs = neck(feats)
    outs = [jax.block_until_ready(o) for o in outs]

    for x, y in zip(feats, outs):
        assert x.shape == y.shape and x.dtype == y.dtype
        assert bool(jnp.all(x == y))

    print("KERNEL_OK")
</pallas_src>

<mosaic_0001>
module attributes {stable_mosaic.version = 11 : i64} {
  func.func @kernel(%arg0: i32, %arg1: memref<2x4x16x16xf32, #tpu.memory_space<any>>, %arg2: memref<2x8x16x16xf32, #tpu.memory_space<any>>, %arg3: memref<2x3x5x5xf32, #tpu.memory_space<any>>, %arg4: memref<2x4x16x16xf32, #tpu.memory_space<any>>, %arg5: memref<2x8x16x16xf32, #tpu.memory_space<any>>, %arg6: memref<2x3x5x5xf32, #tpu.memory_space<any>>, %arg7: memref<3x!tpu.dma_semaphore, #tpu.memory_space<semaphore_mem>>) attributes {dimension_semantics = [#tpu.dimension_semantics<parallel>], iteration_bounds = array<i64: 2>, scalar_prefetch = 0 : i64, scratch_operands = 1 : i64, tpu.core_type = #tpu.core_type<tc>, window_params = [{}, {}, {}, {}, {}, {}]} {
    %c0_i32 = arith.constant 0 : i32
    %0 = arith.cmpi eq, %arg0, %c0_i32 : i32
    %1 = arith.extui %0 : i1 to i32
    %c0_i32_0 = arith.constant 0 : i32
    %2 = arith.cmpi ne, %1, %c0_i32_0 : i32
    scf.if %2 {
      %c0_i32_2 = arith.constant 0 : i32
      %6 = tpu.memref_slice %arg7[%c0_i32_2] : memref<3x!tpu.dma_semaphore, #tpu.memory_space<semaphore_mem>> -> memref<1x!tpu.dma_semaphore, #tpu.memory_space<semaphore_mem>>
      %7 = tpu.memref_squeeze %6 : memref<1x!tpu.dma_semaphore, #tpu.memory_space<semaphore_mem>> -> memref<!tpu.dma_semaphore, #tpu.memory_space<semaphore_mem>>
      tpu.enqueue_dma source(%arg1 : memref<2x4x16x16xf32, #tpu.memory_space<any>>) target(%arg4 : memref<2x4x16x16xf32, #tpu.memory_space<any>>) target_semaphore(%7 : memref<!tpu.dma_semaphore, #tpu.memory_space<semaphore_mem>>)
      %c2_i32 = arith.constant 2 : i32
      %8 = tpu.memref_slice %arg7[%c2_i32] : memref<3x!tpu.dma_semaphore, #tpu.memory_space<semaphore_mem>> -> memref<1x!tpu.dma_semaphore, #tpu.memory_space<semaphore_mem>>
      %9 = tpu.memref_squeeze %8 : memref<1x!tpu.dma_semaphore, #tpu.memory_space<semaphore_mem>> -> memref<!tpu.dma_semaphore, #tpu.memory_space<semaphore_mem>>
      tpu.enqueue_dma source(%arg3 : memref<2x3x5x5xf32, #tpu.memory_space<any>>) target(%arg6 : memref<2x3x5x5xf32, #tpu.memory_space<any>>) target_semaphore(%9 : memref<!tpu.dma_semaphore, #tpu.memory_space<semaphore_mem>>)
      %c0_i32_3 = arith.constant 0 : i32
      %10 = tpu.memref_slice %arg7[%c0_i32_3] : memref<3x!tpu.dma_semaphore, #tpu.memory_space<semaphore_mem>> -> memref<1x!tpu.dma_semaphore, #tpu.memory_space<semaphore_mem>>
      %11 = tpu.memref_squeeze %10 : memref<1x!tpu.dma_semaphore, #tpu.memory_space<semaphore_mem>> -> memref<!tpu.dma_semaphore, #tpu.memory_space<semaphore_mem>>
      tpu.wait_dma2 semaphore(%11 : memref<!tpu.dma_semaphore, #tpu.memory_space<semaphore_mem>>) src(%arg1 : memref<2x4x16x16xf32, #tpu.memory_space<any>>) dst(%arg4 : memref<2x4x16x16xf32, #tpu.memory_space<any>>)
      %c2_i32_4 = arith.constant 2 : i32
      %12 = tpu.memref_slice %arg7[%c2_i32_4] : memref<3x!tpu.dma_semaphore, #tpu.memory_space<semaphore_mem>> -> memref<1x!tpu.dma_semaphore, #tpu.memory_space<semaphore_mem>>
      %13 = tpu.memref_squeeze %12 : memref<1x!tpu.dma_semaphore, #tpu.memory_space<semaphore_mem>> -> memref<!tpu.dma_semaphore, #tpu.memory_space<semaphore_mem>>
      tpu.wait_dma2 semaphore(%13 : memref<!tpu.dma_semaphore, #tpu.memory_space<semaphore_mem>>) src(%arg3 : memref<2x3x5x5xf32, #tpu.memory_space<any>>) dst(%arg6 : memref<2x3x5x5xf32, #tpu.memory_space<any>>)
    } else {
    }
    %c1_i32 = arith.constant 1 : i32
    %3 = arith.cmpi eq, %arg0, %c1_i32 : i32
    %4 = arith.extui %3 : i1 to i32
    %c0_i32_1 = arith.constant 0 : i32
    %5 = arith.cmpi ne, %4, %c0_i32_1 : i32
    scf.if %5 {
      %c1_i32_2 = arith.constant 1 : i32
      %6 = tpu.memref_slice %arg7[%c1_i32_2] : memref<3x!tpu.dma_semaphore, #tpu.memory_space<semaphore_mem>> -> memref<1x!tpu.dma_semaphore, #tpu.memory_space<semaphore_mem>>
      %7 = tpu.memref_squeeze %6 : memref<1x!tpu.dma_semaphore, #tpu.memory_space<semaphore_mem>> -> memref<!tpu.dma_semaphore, #tpu.memory_space<semaphore_mem>>
      tpu.enqueue_dma source(%arg2 : memref<2x8x16x16xf32, #tpu.memory_space<any>>) target(%arg5 : memref<2x8x16x16xf32, #tpu.memory_space<any>>) target_semaphore(%7 : memref<!tpu.dma_semaphore, #tpu.memory_space<semaphore_mem>>)
      %c1_i32_3 = arith.constant 1 : i32
      %8 = tpu.memref_slice %arg7[%c1_i32_3] : memref<3x!tpu.dma_semaphore, #tpu.memory_space<semaphore_mem>> -> memref<1x!tpu.dma_semaphore, #tpu.memory_space<semaphore_mem>>
      %9 = tpu.memref_squeeze %8 : memref<1x!tpu.dma_semaphore, #tpu.memory_space<semaphore_mem>> -> memref<!tpu.dma_semaphore, #tpu.memory_space<semaphore_mem>>
      tpu.wait_dma2 semaphore(%9 : memref<!tpu.dma_semaphore, #tpu.memory_space<semaphore_mem>>) src(%arg2 : memref<2x8x16x16xf32, #tpu.memory_space<any>>) dst(%arg5 : memref<2x8x16x16xf32, #tpu.memory_space<any>>)
    } else {
    }
    return
  }
}

</mosaic_0001>

<llo_original>
// kernel: tpu_custom_call.1
$region0: #{tpu_custom_call.1}
  #allocation0 [shape = 'u32[]', space=smem, size = 0x4, offset = 0x4, fixed_abs, tag = 'smem constant byte address 0x4 - core index']
  #allocation1 [shape = 'u32[144,128]{1,0:T(1,128)}', space=vmem, size = 0x12000, scoped, tag = 'internal scratch']
  #allocation2 [shape = 's32[3]{0}', space=sflag, size = 0xc, scoped, tag = 'scratch operand']
  #allocation3 [shape = 's32[]', space=sflag, size = 0x4, offset = 0, fixed_abs, tag = 'sflag constant byte address 0x0 - dummy sync flag']
  #allocation4 [shape = 'u32[0]{0}', space=smem, size = 0, offset = 0, fixed_abs, tag = 'smem constant byte address 0x0 - null']
  #allocation5 [shape = 's32[]', space=sflag, size = 0x4, offset = 0, fixed_abs, tag = 'sflag constant byte address 0x0 - dummy sync flag']
  #allocation6 [shape = 's32[]', space=sflag, size = 0x4, offset = 0, fixed_abs, tag = 'sflag constant byte address 0x0 - dummy sync flag']
  #allocation7 [shape = 'u32[0]{0}', space=smem, size = 0, offset = 0, fixed_abs, tag = 'smem constant byte address 0x0 - null']
  %s0 = inlined_call_operand.hbm [shape: f32[2,4,16,16], index: 0, kind: input, shape index: {}]
  %s1 = inlined_call_operand.hbm [shape: f32[2,8,16,16], index: 1, kind: input, shape index: {}]
  %s2 = inlined_call_operand.vmem [shape: f32[2,3,5,5], index: 2, kind: input, shape index: {}]
  %s3 = inlined_call_operand.hbm [shape: f32[2,4,16,16], index: 3, kind: output, shape index: {0}]
  %s4 = inlined_call_operand.hbm [shape: f32[2,8,16,16], index: 4, kind: output, shape index: {1}]
  %s5 = inlined_call_operand.vmem [shape: f32[2,3,5,5], index: 5, kind: output, shape index: {2}]
  %6 = xla_tuple %s3, %s4, %s5
  %s7 = sld [smem:[#allocation0]]
  $region54: #{tpu_custom_call.1} parent=0
    _
  %s9 = ssub.s32 1, %s7
  %s10 = scalar_select 0, %s9, %s7
  loop: start=0, step=1, limit=2
  $region2: #{tpu_custom_call.1} parent=0 // loop_pre_header
    _
  $region3: #{tpu_custom_call.1} parent=0 // loop_header
    %s12 = sphi 0, %s16
    %p13 = scmp.ge.s32.totalorder %s12, 2
  $region4: #{tpu_custom_call.1} parent=0 // loop_header_branch
    %15 = sbr.rel (%p13) target = $region8
  $region5: #{tpu_custom_call.1} parent=0 // loop_body
    %s17 = sadd.s32 %s12, 1
    %p18 = scmp.eq.s32.totalorder %s12, 0
    // Predicated region
    $region9: #{tpu_custom_call.1} parent=5 // pred_check
      %p19 = pneg %p18
    $region10: #{tpu_custom_call.1} parent=5 // pred_check_branch
      %21 = sbr.rel (%p19) target = $region12
    $region11: #{tpu_custom_call.1} parent=5 // pred_region
      %s23 = sshll.u32 1, 14
      %s24 = sxor.u32 4294967295, %s23
      %s27 = sshll.u32 3, 24
      %s28 = sxor.u32 4294967295, %s27
      %s29 = sand.u32 0, %s28
      %s31 = sor.u32 %s29, 0
      %34 = dma.general %s0, 2048, %s3, [#allocation2], [#allocation3], [#allocation4], %s31, 0
      %s35 = scalar_lea.sflag [#allocation2], 2
      %p37 = scmp.lt.u32.totalorder 5, 8
      %p38 = pneg %p37
      // Predicated region
      $region13: #{tpu_custom_call.1} parent=11 // pred_check
        _
      $region14: #{tpu_custom_call.1} parent=11 // pred_check_branch
        %40 = sbr.rel (%p37) target = $region16
      $region15: #{tpu_custom_call.1} parent=11 // pred_region
        %s65 = sand.u32 5, 7
        %p66 = scmp.eq.s32.totalorder %s65, 0
        %p67 = pneg %p66
        // Predicated region
        $region28: #{tpu_custom_call.1} parent=15 // pred_check
          _
        $region29: #{tpu_custom_call.1} parent=15 // pred_check_branch
          %69 = sbr.rel (%p66) target = $region31
        $region30: #{tpu_custom_call.1} parent=15 // pred_region
          %s70 = sand.u32 5, 7
          %s71 = ssub.s32 5, %s70
          %s72 = scalar_lea.vmem %s2, %s71
          %s73 = ssub.s32 5, %s70
          %s74 = scalar_lea.vmem %s5, %s73
          loop: start=0, step=1, limit=1
          $region32: #{tpu_custom_call.1} parent=30 // loop_pre_header
            _
          $region33: #{tpu_custom_call.1} parent=30 // loop_header
            %s76 = sphi 0, %s80
            %p77 = scmp.ge.s32.totalorder %s76, 1
            %s81 = sphi %s2, %s2
            %s82 = sphi %s5, %s5
          $region34: #{tpu_custom_call.1} parent=30 // loop_header_branch
            %79 = sbr.rel (%p77) target = $region38
          $region35: #{tpu_custom_call.1} parent=30 // loop_body
            _
          $region36: #{tpu_custom_call.1} parent=30 // loop_footer
            %s80 = sadd.s32 1, %s76
          $region37: #{tpu_custom_call.1} parent=30 // loop_footer_branch
            %75 = sbr.rel target = $region33
          $region38: #{tpu_custom_call.1} parent=30 // loop_exit
            _
          %s83 = sshllo.u32 0, %s70
          loop: start=0, step=1, limit=1
          $region39: #{tpu_custom_call.1} parent=30 // loop_pre_header
            _
          $region40: #{tpu_custom_call.1} parent=30 // loop_header
            %s85 = sphi 0, %s89
            %p86 = scmp.ge.s32.totalorder %s85, 1
            %s90 = sphi %s72, %s72
            %s91 = sphi %s74, %s74
          $region41: #{tpu_custom_call.1} parent=30 // loop_header_branch
            %88 = sbr.rel (%p86) target = $region45
          $region42: #{tpu_custom_call.1} parent=30 // loop_body
            %v92 = vld [vmem:[%s90] sm:%s83]
            %93 = vst [vmem:[%s91] sm:%s83] %v92
            %v94 = vld [vmem:[%s90 + $0x8] sm:%s83]
            %95 = vst [vmem:[%s91 + $0x8] sm:%s83] %v94
            %v96 = vld [vmem:[%s90 + $0x10] sm:%s83]
            %97 = vst [vmem:[%s91 + $0x10] sm:%s83] %v96
            %v98 = vld [vmem:[%s90 + $0x18] sm:%s83]
            %99 = vst [vmem:[%s91 + $0x18] sm:%s83] %v98
            %v100 = vld [vmem:[%s90 + $0x20] sm:%s83]
            %101 = vst [vmem:[%s91 + $0x20] sm:%s83] %v100
            %v102 = vld [vmem:[%s90 + $0x28] sm:%s83]
            %103 = vst [vmem:[%s91 + $0x28] sm:%s83] %v102
          $region43: #{tpu_custom_call.1} parent=30 // loop_footer
            %s89 = sadd.s32 1, %s85
          $region44: #{tpu_custom_call.1} parent=30 // loop_footer_branch
            %84 = sbr.rel target = $region40
          $region45: #{tpu_custom_call.1} parent=30 // loop_exit
            _
        $region31: #{tpu_custom_call.1} parent=15 // pred_fallthru
          _
      $region16: #{tpu_custom_call.1} parent=11 // pred_fallthru
        _
      // Predicated region
      $region17: #{tpu_custom_call.1} parent=11 // pred_check
        %p41 = pneg %p37
      $region18: #{tpu_custom_call.1} parent=11 // pred_check_branch
        %43 = sbr.rel (%p41) target = $region20
      $region19: #{tpu_custom_call.1} parent=11 // pred_region
        %s44 = sshllo.u32 0, 5
        loop: start=0, step=1, limit=1
        $region21: #{tpu_custom_call.1} parent=19 // loop_pre_header
          _
        $region22: #{tpu_custom_call.1} parent=19 // loop_header
          %s46 = sphi 0, %s50
          %p47 = scmp.ge.s32.totalorder %s46, 1
          %s51 = sphi %s2, %s2
          %s52 = sphi %s5, %s5
        $region23: #{tpu_custom_call.1} parent=19 // loop_header_branch
          %49 = sbr.rel (%p47) target = $region27
        $region24: #{tpu_custom_call.1} parent=19 // loop_body
          %v53 = vld [vmem:[%s51] sm:%s44]
          %54 = vst [vmem:[%s52] sm:%s44] %v53
          %v55 = vld [vmem:[%s51 + $0x8] sm:%s44]
          %56 = vst [vmem:[%s52 + $0x8] sm:%s44] %v55
          %v57 = vld [vmem:[%s51 + $0x10] sm:%s44]
          %58 = vst [vmem:[%s52 + $0x10] sm:%s44] %v57
          %v59 = vld [vmem:[%s51 + $0x18] sm:%s44]
          %60 = vst [vmem:[%s52 + $0x18] sm:%s44] %v59
          %v61 = vld [vmem:[%s51 + $0x20] sm:%s44]
          %62 = vst [vmem:[%s52 + $0x20] sm:%s44] %v61
          %v63 = vld [vmem:[%s51 + $0x28] sm:%s44]
          %64 = vst [vmem:[%s52 + $0x28] sm:%s44] %v63
        $region25: #{tpu_custom_call.1} parent=19 // loop_footer
          %s50 = sadd.s32 1, %s46
        $region26: #{tpu_custom_call.1} parent=19 // loop_footer_branch
          %45 = sbr.rel target = $region22
        $region27: #{tpu_custom_call.1} parent=19 // loop_exit
          _
      $region20: #{tpu_custom_call.1} parent=11 // pred_fallthru
        _
      // Predicated region
      $region46: #{tpu_custom_call.1} parent=11 // pred_check
        _
      $region47: #{tpu_custom_call.1} parent=11 // pred_check_branch
        %106 = sbr.rel (0) target = $region49
      $region48: #{tpu_custom_call.1} parent=11 // pred_region
        %107 = vsyncadd %s35, 480
      $region49: #{tpu_custom_call.1} parent=11 // pred_fallthru
        _
      %s108 = smul.u32 2, 4
      %s109 = smul.u32 %s108, 16
      %s110 = smul.u32 %s109, 1
      %s111 = sshll.u32 %s110, 4
      %112 = dma.done [#allocation2], %s111
      %s113 = smul.u32 2, 3
      %s114 = smul.u32 %s113, 5
      %s115 = smul.u32 %s114, 1
      %s116 = sshll.u32 %s115, 4
      %117 = dma.done %s35, %s116
    $region12: #{tpu_custom_call.1} parent=5 // pred_fallthru
      _
    %p118 = scmp.eq.s32.totalorder %s12, 1
    // Predicated region
    $region50: #{tpu_custom_call.1} parent=5 // pred_check
      %p119 = pneg %p118
    $region51: #{tpu_custom_call.1} parent=5 // pred_check_branch
      %121 = sbr.rel (%p119) target = $region53
    $region52: #{tpu_custom_call.1} parent=5 // pred_region
      %s122 = scalar_lea.sflag [#allocation2], 1
      %s124 = sshll.u32 1, 14
      %s125 = sxor.u32 4294967295, %s124
      %s128 = sshll.u32 3, 24
      %s129 = sxor.u32 4294967295, %s128
      %s130 = sand.u32 0, %s129
      %s132 = sor.u32 %s130, 0
      %135 = dma.general %s1, 4096, %s4, %s122, [#allocation6], [#allocation7], %s132, 0
      %s136 = smul.u32 2, 8
      %s137 = smul.u32 %s136, 16
      %s138 = smul.u32 %s137, 1
      %s139 = sshll.u32 %s138, 4
      %140 = dma.done %s122, %s139
    $region53: #{tpu_custom_call.1} parent=5 // pred_fallthru
      _
  $region6: #{tpu_custom_call.1} parent=0 // loop_footer
    %s16 = sadd.s32 1, %s12
  $region7: #{tpu_custom_call.1} parent=0 // loop_footer_branch
    %11 = sbr.rel target = $region3
  $region8: #{tpu_custom_call.1} parent=0 // loop_exit
    _
  %141 = vsyncmov [#allocation2]
  %s142 = vpop.sfrf %141
  %p143 = scmp.eq.s32.totalorder %s142, 0
  %p144 = pneg %p143
  %146 = shalt.err (%p144)
  %s147 = scalar_lea.sflag [#allocation2], 1
  %148 = vsyncmov %s147
  %s149 = vpop.sfrf %148
  %p150 = scmp.eq.s32.totalorder %s149, 0
  %p151 = pneg %p150
  %153 = shalt.err (%p151)
  %s154 = scalar_lea.sflag [#allocation2], 2
  %155 = vsyncmov %s154
  %s156 = vpop.sfrf %155
  %p157 = scmp.eq.s32.totalorder %s156, 0
  %p158 = pneg %p157
  %160 = shalt.err (%p158)

</llo_original>
